<compile_context>
chip_gen: v5e
topology: v5e:2x2
jax: 0.10.0
libtpu: 0.0.40
codegen_flags: <defaults>
</compile_context>

<pallas_src>
import jax
import jax.numpy as jnp
from jax.experimental import pallas as pl
from jax.experimental.pallas import tpu as pltpu

COUT = 3
CIN = 3


def conv1x1_hardswish_pad_kernel(w_ref, x_ref, o_ref):
    # w_ref: SMEM (COUT*CIN,) f32          -- flattened 1x1 conv weights
    # x_ref: VMEM (1, CIN,  H,   W  ) f32  -- one image, natural NCHW block
    # o_ref: VMEM (1, COUT, H+2, W+2) f32  -- padded NCHW output block
    h, w_dim = x_ref.shape[2], x_ref.shape[3]

    # Hoist scalar weight reads, per-channel input slabs and border constants.
    wv = [w_ref[i] for i in range(COUT * CIN)]
    xc = [x_ref[0, c] for c in range(CIN)]            # (H, W) sublane-dense slabs
    zcol = jnp.zeros((h, 1), jnp.float32)
    zrow = jnp.zeros((1, w_dim + 2), jnp.float32)

    for o in range(COUT):
        # t1[o] = sum_c w[o, c] * x[c]  -> scalar-broadcast FMAs on the VPU.
        t1 = wv[o * CIN + 0] * xc[0]
        for c in range(1, CIN):
            t1 = t1 + wv[o * CIN + c] * xc[c]
        # hardswish-style: t1 * clamp(t1 + 3, 0, 6) * (1/6)
        y = t1 * jnp.clip(t1 + 3.0, 0.0, 6.0) * (1.0 / 6.0)
        # Zero border: a bias-free 1x1 conv with padding=1 makes the border of
        # t1 exactly 0, and hardswish(0) = 0 (breaks if a bias / bigger kernel
        # is ever added -- keep this in sync).
        yp = jnp.concatenate([zcol, y, zcol], axis=1)   # (H,   W+2)
        yp = jnp.concatenate([zrow, yp, zrow], axis=0)  # (H+2, W+2)
        o_ref[0, o] = yp                                # per-channel store


def conv1x1_hardswish(x, w):
    """x: (N, CIN, H, W) f32; w: (COUT, CIN) f32 (squeezed 1x1 conv weights).

    Returns hardswish(conv2d(x, w[..., None, None], stride=1, padding=1)),
    shape (N, COUT, H+2, W+2). One fused kernel; no wrapper-side layout passes.
    """
    n, c, h, w_dim = x.shape
    assert c == CIN
    w_flat = w.reshape(COUT * CIN).astype(jnp.float32)

    return pl.pallas_call(
        conv1x1_hardswish_pad_kernel,
        out_shape=jax.ShapeDtypeStruct((n, COUT, h + 2, w_dim + 2), jnp.float32),
        grid=(n,),
        in_specs=[
            # Weights: 9 scalars in SMEM (flat 1-D -> no 2-D SMEM padding blowup).
            pl.BlockSpec(memory_space=pltpu.MemorySpace.SMEM),
            # One full image per grid step, read straight from NCHW.
            pl.BlockSpec((1, CIN, h, w_dim), lambda i: (i, 0, 0, 0)),
        ],
        out_specs=pl.BlockSpec((1, COUT, h + 2, w_dim + 2),
                               lambda i: (i, 0, 0, 0)),
        compiler_params=pltpu.CompilerParams(
            dimension_semantics=("parallel",)),  # shards batch across TCs on v7x
    )(w_flat, x.astype(jnp.float32))


def module_forward(x, *, shortcut=False):
    """Forward of the PyTorch module (its 1x1 conv weights are hard-coded zeros)."""
    n, c, h, w_dim = x.shape
    if shortcut:
        # w == 0  =>  t1 == 0  =>  hardswish(0) == 0: the whole op is a zero
        # tensor, so skip the kernel entirely for the as-specified module.
        return jnp.zeros((n, COUT, h + 2, w_dim + 2), jnp.float32)
    w_zero = jnp.zeros((COUT, CIN), jnp.float32)
    return conv1x1_hardswish(x, w_zero)


def reference_forward(x, w):
    xp = jnp.pad(x, ((0, 0), (0, 0), (1, 1), (1, 1)))
    t1 = jnp.einsum("oc,nchw->nohw", w, xp)
    return t1 * jnp.clip(t1 + 3.0, 0.0, 6.0) / 6.0


if __name__ == "__main__":
    key = jax.random.PRNGKey(0)
    kx, kw = jax.random.split(key)

    # Small input consistent with the module (channels must be 3).
    x = jax.random.normal(kx, (2, 3, 16, 16), dtype=jnp.float32)

    # 1) Nonzero weights: actually exercise the kernel math against a reference.
    w_rand = jax.random.normal(kw, (COUT, CIN), dtype=jnp.float32)
    out_rand = jax.block_until_ready(conv1x1_hardswish(x, w_rand))
    assert out_rand.shape == (2, 3, 18, 18), out_rand.shape
    assert jnp.allclose(out_rand, reference_forward(x, w_rand), atol=1e-5, rtol=1e-5)

    # 2) Exact module semantics (zero weights) through the kernel, plus the
    #    zero-weight short-circuit path.
    out_zero = jax.block_until_ready(module_forward(x))
    assert out_zero.shape == (2, 3, 18, 18), out_zero.shape
    w_zero = jnp.zeros((COUT, CIN), dtype=jnp.float32)
    assert jnp.allclose(out_zero, reference_forward(x, w_zero), atol=1e-5, rtol=1e-5)
    assert jnp.allclose(out_zero, module_forward(x, shortcut=True))

    print("KERNEL_OK")
</pallas_src>

<mosaic_0001>
module attributes {stable_mosaic.version = 11 : i64} {
  func.func @conv1x1_hardswish_pad_kernel(%arg0: i32, %arg1: memref<9xf32, #tpu.memory_space<smem>>, %arg2: memref<1x3x16x16xf32, #tpu.memory_space<vmem>>, %arg3: memref<1x3x18x18xf32, #tpu.memory_space<vmem>>) attributes {dimension_semantics = [#tpu.dimension_semantics<parallel>], iteration_bounds = array<i64: 2>, scalar_prefetch = 0 : i64, scratch_operands = 0 : i64, tpu.core_type = #tpu.core_type<tc>, window_params = [{transform_indices = @transform_0, window_bounds = array<i64: 9>}, {transform_indices = @transform_1, window_bounds = array<i64: 1, 3, 16, 16>}, {transform_indices = @transform_2, window_bounds = array<i64: 1, 3, 18, 18>}]} {
    %c0 = arith.constant 0 : index
    %0 = memref.load %arg1[%c0] : memref<9xf32, #tpu.memory_space<smem>>
    %c1 = arith.constant 1 : index
    %1 = memref.load %arg1[%c1] : memref<9xf32, #tpu.memory_space<smem>>
    %c2 = arith.constant 2 : index
    %2 = memref.load %arg1[%c2] : memref<9xf32, #tpu.memory_space<smem>>
    %c3 = arith.constant 3 : index
    %3 = memref.load %arg1[%c3] : memref<9xf32, #tpu.memory_space<smem>>
    %c4 = arith.constant 4 : index
    %4 = memref.load %arg1[%c4] : memref<9xf32, #tpu.memory_space<smem>>
    %c5 = arith.constant 5 : index
    %5 = memref.load %arg1[%c5] : memref<9xf32, #tpu.memory_space<smem>>
    %c6 = arith.constant 6 : index
    %6 = memref.load %arg1[%c6] : memref<9xf32, #tpu.memory_space<smem>>
    %c7 = arith.constant 7 : index
    %7 = memref.load %arg1[%c7] : memref<9xf32, #tpu.memory_space<smem>>
    %c8 = arith.constant 8 : index
    %8 = memref.load %arg1[%c8] : memref<9xf32, #tpu.memory_space<smem>>
    %c0_0 = arith.constant 0 : index
    %c0_1 = arith.constant 0 : index
    %c0_2 = arith.constant 0 : index
    %c0_3 = arith.constant 0 : index
    %9 = vector.load %arg2[%c0_0, %c0_1, %c0_2, %c0_3] : memref<1x3x16x16xf32, #tpu.memory_space<vmem>>, vector<1x1x16x16xf32>
    %10 = vector.shape_cast %9 : vector<1x1x16x16xf32> to vector<16x16xf32>
    %c0_4 = arith.constant 0 : index
    %c1_5 = arith.constant 1 : index
    %c0_6 = arith.constant 0 : index
    %c0_7 = arith.constant 0 : index
    %11 = vector.load %arg2[%c0_4, %c1_5, %c0_6, %c0_7] : memref<1x3x16x16xf32, #tpu.memory_space<vmem>>, vector<1x1x16x16xf32>
    %12 = vector.shape_cast %11 : vector<1x1x16x16xf32> to vector<16x16xf32>
    %c0_8 = arith.constant 0 : index
    %c2_9 = arith.constant 2 : index
    %c0_10 = arith.constant 0 : index
    %c0_11 = arith.constant 0 : index
    %13 = vector.load %arg2[%c0_8, %c2_9, %c0_10, %c0_11] : memref<1x3x16x16xf32, #tpu.memory_space<vmem>>, vector<1x1x16x16xf32>
    %14 = vector.shape_cast %13 : vector<1x1x16x16xf32> to vector<16x16xf32>
    %cst = arith.constant 0.000000e+00 : f32
    %15 = vector.broadcast %cst : f32 to vector<16x1xf32>
    %cst_12 = arith.constant 0.000000e+00 : f32
    %16 = vector.broadcast %cst_12 : f32 to vector<1x18xf32>
    %17 = vector.broadcast %0 : f32 to vector<16x16xf32>
    %18 = arith.mulf %17, %10 : vector<16x16xf32>
    %19 = vector.broadcast %1 : f32 to vector<16x16xf32>
    %20 = arith.mulf %19, %12 : vector<16x16xf32>
    %21 = arith.addf %18, %20 : vector<16x16xf32>
    %22 = vector.broadcast %2 : f32 to vector<16x16xf32>
    %23 = arith.mulf %22, %14 : vector<16x16xf32>
    %24 = arith.addf %21, %23 : vector<16x16xf32>
    %cst_13 = arith.constant 3.000000e+00 : f32
    %25 = vector.broadcast %cst_13 : f32 to vector<16x16xf32>
    %26 = arith.addf %24, %25 : vector<16x16xf32>
    %cst_14 = arith.constant 0.000000e+00 : f32
    %cst_15 = arith.constant 6.000000e+00 : f32
    %27 = vector.broadcast %cst_14 : f32 to vector<16x16xf32>
    %28 = arith.maximumf %27, %26 : vector<16x16xf32>
    %29 = vector.broadcast %cst_15 : f32 to vector<16x16xf32>
    %30 = arith.minimumf %29, %28 : vector<16x16xf32>
    %31 = arith.mulf %24, %30 : vector<16x16xf32>
    %cst_16 = arith.constant 0.166666672 : f32
    %32 = vector.broadcast %cst_16 : f32 to vector<16x16xf32>
    %33 = arith.mulf %31, %32 : vector<16x16xf32>
    %34 = tpu.concatenate %15, %33, %15 in 1 : vector<16x1xf32>, vector<16x16xf32>, vector<16x1xf32> -> vector<16x18xf32>
    %35 = tpu.concatenate %16, %34, %16 in 0 : vector<1x18xf32>, vector<16x18xf32>, vector<1x18xf32> -> vector<18x18xf32>
    %c0_17 = arith.constant 0 : index
    %c0_18 = arith.constant 0 : index
    %c0_19 = arith.constant 0 : index
    %c0_20 = arith.constant 0 : index
    %36 = vector.load %arg3[%c0_17, %c0_18, %c0_19, %c0_20] : memref<1x3x18x18xf32, #tpu.memory_space<vmem>>, vector<1x1x18x18xf32>
    %37 = vector.shape_cast %36 : vector<1x1x18x18xf32> to vector<18x18xf32>
    %38 = vector.shape_cast %35 : vector<18x18xf32> to vector<1x1x18x18xf32>
    tpu.vector_store %arg3[%c0_17, %c0_18, %c0_19, %c0_20], %38 {strides = array<i32>} : memref<1x3x18x18xf32, #tpu.memory_space<vmem>>, vector<1x1x18x18xf32>,
    %39 = vector.broadcast %3 : f32 to vector<16x16xf32>
    %40 = arith.mulf %39, %10 : vector<16x16xf32>
    %41 = vector.broadcast %4 : f32 to vector<16x16xf32>
    %42 = arith.mulf %41, %12 : vector<16x16xf32>
    %43 = arith.addf %40, %42 : vector<16x16xf32>
    %44 = vector.broadcast %5 : f32 to vector<16x16xf32>
    %45 = arith.mulf %44, %14 : vector<16x16xf32>
    %46 = arith.addf %43, %45 : vector<16x16xf32>
    %cst_21 = arith.constant 3.000000e+00 : f32
    %47 = vector.broadcast %cst_21 : f32 to vector<16x16xf32>
    %48 = arith.addf %46, %47 : vector<16x16xf32>
    %cst_22 = arith.constant 0.000000e+00 : f32
    %cst_23 = arith.constant 6.000000e+00 : f32
    %49 = vector.broadcast %cst_22 : f32 to vector<16x16xf32>
    %50 = arith.maximumf %49, %48 : vector<16x16xf32>
    %51 = vector.broadcast %cst_23 : f32 to vector<16x16xf32>
    %52 = arith.minimumf %51, %50 : vector<16x16xf32>
    %53 = arith.mulf %46, %52 : vector<16x16xf32>
    %cst_24 = arith.constant 0.166666672 : f32
    %54 = vector.broadcast %cst_24 : f32 to vector<16x16xf32>
    %55 = arith.mulf %53, %54 : vector<16x16xf32>
    %56 = tpu.concatenate %15, %55, %15 in 1 : vector<16x1xf32>, vector<16x16xf32>, vector<16x1xf32> -> vector<16x18xf32>
    %57 = tpu.concatenate %16, %56, %16 in 0 : vector<1x18xf32>, vector<16x18xf32>, vector<1x18xf32> -> vector<18x18xf32>
    %c0_25 = arith.constant 0 : index
    %c1_26 = arith.constant 1 : index
    %c0_27 = arith.constant 0 : index
    %c0_28 = arith.constant 0 : index
    %58 = vector.load %arg3[%c0_25, %c1_26, %c0_27, %c0_28] : memref<1x3x18x18xf32, #tpu.memory_space<vmem>>, vector<1x1x18x18xf32>
    %59 = vector.shape_cast %58 : vector<1x1x18x18xf32> to vector<18x18xf32>
    %60 = vector.shape_cast %57 : vector<18x18xf32> to vector<1x1x18x18xf32>
    tpu.vector_store %arg3[%c0_25, %c1_26, %c0_27, %c0_28], %60 {strides = array<i32>} : memref<1x3x18x18xf32, #tpu.memory_space<vmem>>, vector<1x1x18x18xf32>,
    %61 = vector.broadcast %6 : f32 to vector<16x16xf32>
    %62 = arith.mulf %61, %10 : vector<16x16xf32>
    %63 = vector.broadcast %7 : f32 to vector<16x16xf32>
    %64 = arith.mulf %63, %12 : vector<16x16xf32>
    %65 = arith.addf %62, %64 : vector<16x16xf32>
    %66 = vector.broadcast %8 : f32 to vector<16x16xf32>
    %67 = arith.mulf %66, %14 : vector<16x16xf32>
    %68 = arith.addf %65, %67 : vector<16x16xf32>
    %cst_29 = arith.constant 3.000000e+00 : f32
    %69 = vector.broadcast %cst_29 : f32 to vector<16x16xf32>
    %70 = arith.addf %68, %69 : vector<16x16xf32>
    %cst_30 = arith.constant 0.000000e+00 : f32
    %cst_31 = arith.constant 6.000000e+00 : f32
    %71 = vector.broadcast %cst_30 : f32 to vector<16x16xf32>
    %72 = arith.maximumf %71, %70 : vector<16x16xf32>
    %73 = vector.broadcast %cst_31 : f32 to vector<16x16xf32>
    %74 = arith.minimumf %73, %72 : vector<16x16xf32>
    %75 = arith.mulf %68, %74 : vector<16x16xf32>
    %cst_32 = arith.constant 0.166666672 : f32
    %76 = vector.broadcast %cst_32 : f32 to vector<16x16xf32>
    %77 = arith.mulf %75, %76 : vector<16x16xf32>
    %78 = tpu.concatenate %15, %77, %15 in 1 : vector<16x1xf32>, vector<16x16xf32>, vector<16x1xf32> -> vector<16x18xf32>
    %79 = tpu.concatenate %16, %78, %16 in 0 : vector<1x18xf32>, vector<16x18xf32>, vector<1x18xf32> -> vector<18x18xf32>
    %c0_33 = arith.constant 0 : index
    %c2_34 = arith.constant 2 : index
    %c0_35 = arith.constant 0 : index
    %c0_36 = arith.constant 0 : index
    %80 = vector.load %arg3[%c0_33, %c2_34, %c0_35, %c0_36] : memref<1x3x18x18xf32, #tpu.memory_space<vmem>>, vector<1x1x18x18xf32>
    %81 = vector.shape_cast %80 : vector<1x1x18x18xf32> to vector<18x18xf32>
    %82 = vector.shape_cast %79 : vector<18x18xf32> to vector<1x1x18x18xf32>
    tpu.vector_store %arg3[%c0_33, %c2_34, %c0_35, %c0_36], %82 {strides = array<i32>} : memref<1x3x18x18xf32, #tpu.memory_space<vmem>>, vector<1x1x18x18xf32>,
    return
  }
  func.func @transform_0(%arg0: i32) -> i32 {
    %c0_i32 = arith.constant 0 : i32
    %c0_i32_0 = arith.constant 0 : i32
    return %c0_i32 : i32
  }
  func.func @transform_1(%arg0: i32) -> (i32, i32, i32, i32) {
    %c0_i32 = arith.constant 0 : i32
    %c0_i32_0 = arith.constant 0 : i32
    %c0_i32_1 = arith.constant 0 : i32
    %c0_i32_2 = arith.constant 0 : i32
    return %arg0, %c0_i32, %c0_i32_0, %c0_i32_1 : i32, i32, i32, i32
  }
  func.func @transform_2(%arg0: i32) -> (i32, i32, i32, i32) {
    %c0_i32 = arith.constant 0 : i32
    %c0_i32_0 = arith.constant 0 : i32
    %c0_i32_1 = arith.constant 0 : i32
    %c0_i32_2 = arith.constant 0 : i32
    return %arg0, %c0_i32, %c0_i32_0, %c0_i32_1 : i32, i32, i32, i32
  }
}

</mosaic_0001>

<llo_original>
// kernel: tpu_custom_call.1
$region0: #{tpu_custom_call.1}
  #allocation0 [shape = 'u32[]', space=smem, size = 0x4, offset = 0x4, fixed_abs, tag = 'smem constant byte address 0x4 - core index']
  #allocation1 [shape = 'u32[72,128]{1,0:T(1,128)}', space=vmem, size = 0x9000, scoped, tag = 'internal scratch']
  %s0 = inlined_call_operand.hbm [shape: f32[9], index: 0, kind: input, shape index: {}]
  %s1 = inlined_call_operand.hbm [shape: f32[2,3,16,16], index: 1, kind: input, shape index: {}]
  %s2 = inlined_call_operand.vmem [shape: f32[2,3,18,18], index: 2, kind: output, shape index: {}]
  %s3 = sld [smem:[#allocation0]]
  $region49: #{tpu_custom_call.1} parent=0
    _
  %s5 = ssub.s32 1, %s3
  %s6 = scalar_select 0, %s5, %s3
  $region1: #{tpu_custom_call.1} parent=0
    #allocation2 [shape = 'u8[512]{0}', space=smem, size = 0x200, scoped, tag = 'input window, operand 0, single buffered']
    #allocation3 [shape = 's32[2]{0}', space=sflag, size = 0x8, scoped, tag = 'scoped memory for tpu_custom_call.1']
    #allocation4 [shape = 's32[2]{0}', space=sflag, size = 0x8, scoped, tag = 'scoped memory for tpu_custom_call.1']
    #allocation5 [shape = 'u8[49152]{0}', space=vmem, size = 0xc000, scoped, tag = 'input window, operand 1']
    %7 = vsyncpa [#allocation4], 0
    %8 = vsyncpa [#allocation3], 0
    %s9 = scalar_lea.sflag [#allocation3], 1
    %10 = vsyncpa %s9, 0
    loop: start=0, step=1, limit=4
    $region2: #{tpu_custom_call.1} parent=1 // loop_pre_header
      _
    $region3: #{tpu_custom_call.1} parent=1 // loop_header
      %s12 = sphi 0, %s16
      %p13 = scmp.ge.s32.totalorder %s12, 4
      %s20 = sphi 0, %s20
      %s22 = sphi 0, %s20
      %s23 = sphi 0, %s22
      %s37 = sphi 0, %s23
      %s43 = sphi 0, %s45
      %s46 = sphi 0, %s43
      %s47 = sphi 0, %s46
      %s63 = sphi 0, %s47
      %s69 = sphi 0, %s71
      %s72 = sphi 0, %s69
      %s73 = sphi 0, %s72
      %s89 = sphi 0, %s73
    $region4: #{tpu_custom_call.1} parent=1 // loop_header_branch
      %15 = sbr.rel (%p13) target = $region8
    $region5: #{tpu_custom_call.1} parent=1 // loop_body
      %s17 = ssub.s32 %s12, 1
      %s18 = ssub.s32 %s12, 2
      %s19 = sadd.s32 %s12, 1
      %s21 = sadd.s32 %s20, 1
      %p24 = scmp.eq.s32.totalorder %s12, 1
      %p25 = scmp.ne.s32.totalorder %s20, %s22
      %p26 = scmp.eq.s32.totalorder %s12, 0
      %p27 = por %p25, %p26
      %p28 = scmp.ne.s32.totalorder %s20, %s22
      %p29 = scmp.eq.s32.totalorder %s17, 1
      %p30 = por %p28, %p29
      %p31 = scmp.ne.s32.totalorder %s22, %s23
      %p32 = scmp.eq.s32.totalorder %s17, 0
      %p33 = por %p31, %p32
      %p34 = scmp.ne.s32.totalorder %s22, %s23
      %p35 = scmp.eq.s32.totalorder %s18, 1
      %p36 = por %p34, %p35
      %p38 = scmp.ne.s32.totalorder %s23, %s37
      %p39 = scmp.eq.s32.totalorder %s18, 0
      %p40 = por %p38, %p39
      %s41 = ssub.s32 %s12, %s19
      %p42 = scmp.eq.s32.totalorder %s41, 0
      %s44 = sadd.s32 %s43, 1
      %s45 = scalar_select %p42, %s43, %s44
      %p48 = pneg %p42
      %p49 = scmp.eq.s32.totalorder %s12, 1
      %p50 = por %p48, %p49
      %p51 = scmp.ne.s32.totalorder %s43, %s46
      %p52 = scmp.eq.s32.totalorder %s12, 0
      %p53 = por %p51, %p52
      %p54 = scmp.ne.s32.totalorder %s43, %s46
      %p55 = scmp.eq.s32.totalorder %s17, 1
      %p56 = por %p54, %p55
      %p57 = scmp.ne.s32.totalorder %s46, %s47
      %p58 = scmp.eq.s32.totalorder %s17, 0
      %p59 = por %p57, %p58
      %p60 = scmp.ne.s32.totalorder %s46, %s47
      %p61 = scmp.eq.s32.totalorder %s18, 1
      %p62 = por %p60, %p61
      %p64 = scmp.ne.s32.totalorder %s47, %s63
      %p65 = scmp.eq.s32.totalorder %s18, 0
      %p66 = por %p64, %p65
      %s67 = ssub.s32 %s12, %s19
      %p68 = scmp.eq.s32.totalorder %s67, 0
      %s70 = sadd.s32 %s69, 1
      %s71 = scalar_select %p68, %s69, %s70
      %p74 = pneg %p68
      %p75 = scmp.eq.s32.totalorder %s12, 1
      %p76 = por %p74, %p75
      %p77 = scmp.ne.s32.totalorder %s69, %s72
      %p78 = scmp.eq.s32.totalorder %s12, 0
      %p79 = por %p77, %p78
      %p80 = scmp.ne.s32.totalorder %s69, %s72
      %p81 = scmp.eq.s32.totalorder %s17, 1
      %p82 = por %p80, %p81
      %p83 = scmp.ne.s32.totalorder %s72, %s73
      %p84 = scmp.eq.s32.totalorder %s17, 0
      %p85 = por %p83, %p84
      %p86 = scmp.ne.s32.totalorder %s72, %s73
      %p87 = scmp.eq.s32.totalorder %s18, 1
      %p88 = por %p86, %p87
      %p90 = scmp.ne.s32.totalorder %s73, %s89
      %p91 = scmp.eq.s32.totalorder %s18, 0
      %p92 = por %p90, %p91
      %p93 = scmp.le.s32.totalorder 1, %s12
      %p94 = scmp.lt.s32.totalorder %s12, 3
      %p95 = pnand %p93, %p94
      %p96 = pneg %p95
      // Predicated region
      $region9: #{tpu_custom_call.1} parent=5 // pred_check
        _
      $region10: #{tpu_custom_call.1} parent=5 // pred_check_branch
        %98 = sbr.rel (%p95) target = $region12
      $region11: #{tpu_custom_call.1} parent=5 // pred_region
        %s99 = ssub.s32 %s12, 1
        // Predicated region
        $region13: #{tpu_custom_call.1} parent=11 // pred_check
          %p100 = pneg %p33
        $region14: #{tpu_custom_call.1} parent=11 // pred_check_branch
          %102 = sbr.rel (%p100) target = $region16
        $region15: #{tpu_custom_call.1} parent=11 // pred_region
          %104 = vsyncadd [#allocation4], 0
          %s106 = sshll.u32 %s0, 4
          %s107 = int_to_ptr.hbm [resolvable:$true] %s106
          %109 = dma.hbm_to_smem %s107, 16, [#allocation2], [#allocation4]
        $region16: #{tpu_custom_call.1} parent=11 // pred_fallthru
          _
      $region12: #{tpu_custom_call.1} parent=5 // pred_fallthru
        _
      %p110 = scmp.lt.s32.totalorder %s12, 2
      // Predicated region
      $region17: #{tpu_custom_call.1} parent=5 // pred_check
        %p111 = pneg %p110
      $region18: #{tpu_custom_call.1} parent=5 // pred_check_branch
        %113 = sbr.rel (%p111) target = $region20
      $region19: #{tpu_custom_call.1} parent=5 // pred_region
        // Predicated region
        $region21: #{tpu_custom_call.1} parent=19 // pred_check
          %p114 = pneg %p53
        $region22: #{tpu_custom_call.1} parent=19 // pred_check_branch
          %116 = sbr.rel (%p114) target = $region24
        $region23: #{tpu_custom_call.1} parent=19 // pred_region
          %s117 = sand.u32 %s43, 1
          %s118 = scalar_lea.sflag [#allocation3], %s117
          %s119 = sand.u32 %s43, 1
          %s120 = smul.addr %s119, 48
          %s121 = scalar_lea.vmem [#allocation5], %s120
          %123 = vsyncadd %s118, 0
          %s124 = smul.addr %s12, 6
          %s125 = smul.addr %s124, 8
          %s126 = scalar_lea.hbm %s1, %s125
          %s127 = sshll.u32 %s126, 4
          %s128 = int_to_ptr.hbm [resolvable:$true] %s127
          %s129 = sshll.u32 %s121, 4
          %s130 = int_to_ptr.vmem [resolvable:$true] %s129
          %135 = dma.hbm_to_vmem [thread:$0]  %s128, 768, %s130, %s118, 128, 128, 8
        $region24: #{tpu_custom_call.1} parent=19 // pred_fallthru
          _
      $region20: #{tpu_custom_call.1} parent=5 // pred_fallthru
        _
      %p136 = scmp.le.s32.totalorder 1, %s12
      %p137 = scmp.lt.s32.totalorder %s12, 3
      %p138 = pnand %p136, %p137
      %p139 = pneg %p138
      // Predicated region
      $region25: #{tpu_custom_call.1} parent=5 // pred_check
        _
      $region26: #{tpu_custom_call.1} parent=5 // pred_check_branch
        %141 = sbr.rel (%p138) target = $region28
      $region27: #{tpu_custom_call.1} parent=5 // pred_region
        %s142 = ssub.s32 %s12, 1
        // Predicated region
        $region29: #{tpu_custom_call.1} parent=27 // pred_check
          %p143 = pneg %p33
        $region30: #{tpu_custom_call.1} parent=27 // pred_check_branch
          %145 = sbr.rel (%p143) target = $region32
        $region31: #{tpu_custom_call.1} parent=27 // pred_region
          %147 = dma.done [#allocation4], 16
        $region32: #{tpu_custom_call.1} parent=27 // pred_fallthru
          _
        %s148 = sand.u32 %s46, 1
        %s149 = scalar_lea.sflag [#allocation3], %s148
        %s150 = sand.u32 %s46, 1
        %s151 = smul.addr %s150, 48
        %s152 = scalar_lea.vmem [#allocation5], %s151
        // Predicated region
        $region33: #{tpu_custom_call.1} parent=27 // pred_check
          %p153 = pneg %p59
        $region34: #{tpu_custom_call.1} parent=27 // pred_check_branch
          %155 = sbr.rel (%p153) target = $region36
        $region35: #{tpu_custom_call.1} parent=27 // pred_region
          %157 = dma.done %s149, 768
        $region36: #{tpu_custom_call.1} parent=27 // pred_fallthru
          _
        %158 = sfence
        %p159 = pneg %p33
        %p160 = pneg %p30
        %s161 = sand.u32 %s46, 1
        %s162 = scalar_lea.sflag [#allocation3], %s161
        %s163 = sand.u32 %s46, 1
        %s164 = smul.addr %s163, 48
        %s165 = scalar_lea.vmem [#allocation5], %s164
        %p166 = pneg %p59
        %p167 = pneg %p56
        %p168 = pneg %p85
        %p169 = pneg %p82
        %p170 = scmp.lt.s32.totalorder %s17, 1
        %s171 = scalar_select %p170, %s17, 1
        %s172 = smul.addr %s171, 9
        %s173 = smul.addr %s172, 8
        %s174 = scalar_lea.vmem %s2, %s173
        %p175 = scmp.lt.s32.totalorder %s17, 1
        %s176 = scalar_select %p175, %s17, 1
        %s177 = smul.addr %s176, 9
        %s178 = smul.addr %s177, 8
        %s179 = scalar_lea.vmem %s2, %s178
        %s180 = sld [smem:[#allocation2]]
        %s181 = sld [smem:[#allocation2 + $0x1]]
        %s182 = sld [smem:[#allocation2 + $0x2]]
        %s183 = sld [smem:[#allocation2 + $0x3]]
        %s184 = sld [smem:[#allocation2 + $0x4]]
        %s185 = sld [smem:[#allocation2 + $0x5]]
        %s186 = sld [smem:[#allocation2 + $0x6]]
        %s187 = sld [smem:[#allocation2 + $0x7]]
        %s188 = sld [smem:[#allocation2 + $0x8]]
        %v189 = vld [vmem:[%s152] sm:$0xff]
        %v190 = vld [vmem:[%s152 + $0x8] sm:$0xff]
        %s191 = scalar_lea.vmem %s152, 16 [#allocation5]
        %v192 = vld [vmem:[%s191] sm:$0xff]
        %v193 = vld [vmem:[%s191 + $0x8] sm:$0xff]
        %s194 = scalar_lea.vmem %s152, 32 [#allocation5]
        %v195 = vld [vmem:[%s194] sm:$0xff]
        %v196 = vld [vmem:[%s194 + $0x8] sm:$0xff]
        %v197 = vstv %s180
        %v198 = vmul.f32 %v197, %v189
        %v199 = vmul.f32 %v197, %v190
        %v200 = vstv %s181
        %v201 = vmul.f32 %v200, %v192
        %v202 = vmul.f32 %v200, %v193
        %v203 = vadd.f32 %v198, %v201
        %v204 = vadd.f32 %v199, %v202
        %v205 = vstv %s182
        %v206 = vmul.f32 %v205, %v195
        %v207 = vmul.f32 %v205, %v196
        %v208 = vadd.f32 %v203, %v206
        %v209 = vadd.f32 %v204, %v207
        %v210 = vadd.f32 %v208, 3.0
        %v211 = vadd.f32 %v209, 3.0
        %v212 = vmax.f32 %v210, 0.0
        %v213 = vmax.f32 %v211, 0.0
        %v214 = vmin.f32 %v212, 6.0
        %v215 = vmin.f32 %v213, 6.0
        %v216 = vmul.f32 %v208, %v214
        %v217 = vmul.f32 %v209, %v215
        %v218 = vmul.f32 %v216, 0.16666667
        %v219 = vmul.f32 %v217, 0.16666667
        %222 = vrot.lane.b32.xlu0 %v218, 1
        %v223 = vpop.permute.xlu0 %222
        %224 = vrot.lane.b32.xlu0 %v219, 1
        %v225 = vpop.permute.xlu0 %224
        %vm228 = vcmask 7168
        %v229 = vsel %vm228, 0.0, %v223
        %v230 = vsel %vm228, 0.0, %v225
        %vm231 = vcmask 138240
        %v232 = vsel %vm231, %v229, 0.0
        %v233 = vsel %vm231, %v230, 0.0
        %vm236 = vcmask 1040384
        %v237 = vrot.slane %v232, 7
        %v238 = vrot.slane %v233, 7
        %v239 = vsel %vm236, %v237, %v238
        %v243 = vsel %vm236, 0.0, %v237
        %v244 = vsel %vm236, %v238, 0.0
        %vm245 = vcmask 146432
        %246 = vst.msk [vmem:[%s179] sm:$0xff] %vm245, %v243
        %247 = vst.msk [vmem:[%s179 + $0x8] sm:$0xff] %vm245, %v239
        %vm248 = vcmask 140288
        %249 = vst.msk [vmem:[%s179 + $0x10] sm:$0x3] %vm248, %v244
        %v250 = vstv %s183
        %v251 = vmul.f32 %v250, %v189
        %v252 = vmul.f32 %v250, %v190
        %v253 = vstv %s184
        %v254 = vmul.f32 %v253, %v192
        %v255 = vmul.f32 %v253, %v193
        %v256 = vadd.f32 %v251, %v254
        %v257 = vadd.f32 %v252, %v255
        %v258 = vstv %s185
        %v259 = vmul.f32 %v258, %v195
        %v260 = vmul.f32 %v258, %v196
        %v261 = vadd.f32 %v256, %v259
        %v262 = vadd.f32 %v257, %v260
        %v263 = vadd.f32 %v261, 3.0
        %v264 = vadd.f32 %v262, 3.0
        %v265 = vmax.f32 %v263, 0.0
        %v266 = vmax.f32 %v264, 0.0
        %v267 = vmin.f32 %v265, 6.0
        %v268 = vmin.f32 %v266, 6.0
        %v269 = vmul.f32 %v261, %v267
        %v270 = vmul.f32 %v262, %v268
        %v271 = vmul.f32 %v269, 0.16666667
        %v272 = vmul.f32 %v270, 0.16666667
        %275 = vrot.lane.b32.xlu0 %v271, 1
        %v276 = vpop.permute.xlu0 %275
        %277 = vrot.lane.b32.xlu0 %v272, 1
        %v278 = vpop.permute.xlu0 %277
        %v281 = vsel %vm228, 0.0, %v276
        %v282 = vsel %vm228, 0.0, %v278
        %v283 = vsel %vm231, %v281, 0.0
        %v284 = vsel %vm231, %v282, 0.0
        %v287 = vrot.slane %v283, 7
        %v288 = vrot.slane %v284, 7
        %v289 = vsel %vm236, %v287, %v288
        %v293 = vsel %vm236, 0.0, %v287
        %v294 = vsel %vm236, %v288, 0.0
        %s295 = scalar_lea.vmem %s179, 24
        %296 = vst.msk [vmem:[%s295] sm:$0xff] %vm245, %v293
        %297 = vst.msk [vmem:[%s295 + $0x8] sm:$0xff] %vm245, %v289
        %298 = vst.msk [vmem:[%s295 + $0x10] sm:$0x3] %vm248, %v294
        %v299 = vstv %s186
        %v300 = vmul.f32 %v299, %v189
        %v301 = vmul.f32 %v299, %v190
        %v302 = vstv %s187
        %v303 = vmul.f32 %v302, %v192
        %v304 = vmul.f32 %v302, %v193
        %v305 = vadd.f32 %v300, %v303
        %v306 = vadd.f32 %v301, %v304
        %v307 = vstv %s188
        %v308 = vmul.f32 %v307, %v195
        %v309 = vmul.f32 %v307, %v196
        %v310 = vadd.f32 %v305, %v308
        %v311 = vadd.f32 %v306, %v309
        %v312 = vadd.f32 %v310, 3.0
        %v313 = vadd.f32 %v311, 3.0
        %v314 = vmax.f32 %v312, 0.0
        %v315 = vmax.f32 %v313, 0.0
        %v316 = vmin.f32 %v314, 6.0
        %v317 = vmin.f32 %v315, 6.0
        %v318 = vmul.f32 %v310, %v316
        %v319 = vmul.f32 %v311, %v317
        %v320 = vmul.f32 %v318, 0.16666667
        %v321 = vmul.f32 %v319, 0.16666667
        %324 = vrot.lane.b32.xlu0 %v320, 1
        %v325 = vpop.permute.xlu0 %324
        %326 = vrot.lane.b32.xlu0 %v321, 1
        %v327 = vpop.permute.xlu0 %326
        %v330 = vsel %vm228, 0.0, %v325
        %v331 = vsel %vm228, 0.0, %v327
        %v332 = vsel %vm231, %v330, 0.0
        %v333 = vsel %vm231, %v331, 0.0
        %v336 = vrot.slane %v332, 7
        %v337 = vrot.slane %v333, 7
        %v338 = vsel %vm236, %v336, %v337
        %v342 = vsel %vm236, 0.0, %v336
        %v343 = vsel %vm236, %v337, 0.0
        %s344 = scalar_lea.vmem %s179, 48
        %345 = vst.msk [vmem:[%s344] sm:$0xff] %vm245, %v342
        %346 = vst.msk [vmem:[%s344 + $0x8] sm:$0xff] %vm245, %v338
        %347 = vst.msk [vmem:[%s344 + $0x10] sm:$0x3] %vm248, %v343
        %p348 = scmp.lt.s32.totalorder %s17, 1
        %s349 = scalar_select %p348, %s17, 1
        %s350 = smul.addr %s349, 9
        %s351 = smul.addr %s350, 8
        %s352 = scalar_lea.vmem %s2, %s351
        // Predicated region
        $region37: #{tpu_custom_call.1} parent=27 // pred_check
          %p353 = pneg %p82
        $region38: #{tpu_custom_call.1} parent=27 // pred_check_branch
          %355 = sbr.rel (%p353) target = $region40
        $region39: #{tpu_custom_call.1} parent=27 // pred_region
          _
        $region40: #{tpu_custom_call.1} parent=27 // pred_fallthru
          _
      $region28: #{tpu_custom_call.1} parent=5 // pred_fallthru
        _
      %p356 = scmp.le.s32.totalorder 2, %s12
      // Predicated region
      $region41: #{tpu_custom_call.1} parent=5 // pred_check
        %p357 = pneg %p356
      $region42: #{tpu_custom_call.1} parent=5 // pred_check_branch
        %359 = sbr.rel (%p357) target = $region44
      $region43: #{tpu_custom_call.1} parent=5 // pred_region
        %s360 = ssub.s32 %s12, 2
        // Predicated region
        $region45: #{tpu_custom_call.1} parent=43 // pred_check
          %p361 = pneg %p88
        $region46: #{tpu_custom_call.1} parent=43 // pred_check_branch
          %363 = sbr.rel (%p361) target = $region48
        $region47: #{tpu_custom_call.1} parent=43 // pred_region
          %p364 = scmp.lt.s32.totalorder %s18, 1
          %s365 = scalar_select %p364, %s18, 1
          %s366 = smul.addr %s365, 9
          %s367 = smul.addr %s366, 8
          %s368 = scalar_lea.vmem %s2, %s367
        $region48: #{tpu_custom_call.1} parent=43 // pred_fallthru
          _
      $region44: #{tpu_custom_call.1} parent=5 // pred_fallthru
        _
    $region6: #{tpu_custom_call.1} parent=1 // loop_footer
      %s16 = sadd.s32 1, %s12
    $region7: #{tpu_custom_call.1} parent=1 // loop_footer_branch
      %11 = sbr.rel target = $region3
    $region8: #{tpu_custom_call.1} parent=1 // loop_exit
      _
    %369 = vsyncpa [#allocation3], 1
    %s370 = scalar_lea.sflag [#allocation3], 1
    %371 = vsyncpa %s370, 1
    %372 = vsyncpa [#allocation4], 1
    %s373 = scalar_lea.sflag [#allocation4], 1
    %374 = vsyncpa %s373, 1

</llo_original>
